<compile_context>
chip_gen: v6e
topology: v6e:2x2x1
jax: 0.10.0
libtpu: 0.0.40
codegen_flags: <defaults>
</compile_context>

<pallas_src>
from functools import lru_cache

import numpy as np
import jax
import jax.numpy as jnp
from jax import lax
from jax.experimental import pallas as pl
from jax.experimental.pallas import tpu as pltpu

_LANE = 128             # vreg lane width
_SUB = 8                # vreg sublane height
_CHUNK_LANES = 1024     # inner-loop chunk: (8, 1024) f32 = 32 KiB = 8 vregs
_CHUNKS_PER_BLOCK = 64  # pipeline block: 64 chunks = 2 MiB f32 per grid step
                        # (x2 pipeline buffers + int8 mask stays well under the
                        #  16/32 MiB default scoped VMEM on v5e/v6e/v7x)


def _cdiv(a, b):
    return -(-a // b)


def _round_up(a, b):
    return _cdiv(a, b) * b


def _plan(n, chunk_lanes=_CHUNK_LANES, chunks_per_block=_CHUNKS_PER_BLOCK):
    """Lay out n elements as (t_pad, 8, chunk_lanes) chunk-tiles grouped into
    `steps` equal grid blocks of `chunks_per_block` tiles each."""
    n = int(n)
    assert n > 0
    assert chunk_lanes % _LANE == 0 and chunk_lanes >= _LANE
    assert chunks_per_block >= 1
    chunk_elems = _SUB * chunk_lanes
    if n <= chunk_elems:
        cl = _round_up(_cdiv(n, _SUB), _LANE)   # shrink the single chunk to fit
        tb, steps = 1, 1
    else:
        cl = chunk_lanes
        t = _cdiv(n, chunk_elems)               # chunk-tiles needed
        steps = _cdiv(t, chunks_per_block)      # grid steps
        tb = _cdiv(t, steps)                    # chunk-tiles per step (balanced)
    t_pad = tb * steps
    return {"n": n, "chunk_lanes": cl, "chunks_per_block": tb,
            "steps": steps, "t_pad": t_pad, "n_pad": t_pad * _SUB * cl}


def _pack(x, plan):
    """Zero-pad a flat vector and view it as (t_pad, 8, chunk_lanes)."""
    flat = x.reshape(-1)
    pad = plan["n_pad"] - plan["n"]
    if pad:
        flat = jnp.pad(flat, (0, pad))          # padded scores are 0 -> add nothing
    return flat.reshape(plan["t_pad"], _SUB, plan["chunk_lanes"])


def _make_sum_kernel(with_mask: bool, chunks_per_block: int, unroll: int):
    """Streaming (optionally masked) sum.

    Block refs: scores (tb, 8, CL) [, mask (tb, 8, CL) int8], out (8, CL) f32.
    The output tile is resident across the grid (accumulator)."""

    def kernel(x_ref, *rest):
        if with_mask:
            m_ref, o_ref = rest
        else:
            m_ref, (o_ref,) = None, rest

        def load(j):
            x = x_ref[j].astype(jnp.float32)          # in-kernel upcast
            if with_mask:
                x = jnp.where(m_ref[j] != 0, x, jnp.float32(0.0))
            return x

        # Walk the block one (8, CL) chunk-tile at a time; the carried f32
        # accumulator is ~8 vregs so live vector state stays tiny (no spills).
        if chunks_per_block == 1:
            acc = load(0)
        else:
            acc = lax.fori_loop(1, chunks_per_block,
                                lambda j, a: a + load(j),
                                load(0), unroll=unroll)

        k = pl.program_id(0)

        @pl.when(k == 0)
        def _init():
            o_ref[...] = acc

        @pl.when(k > 0)
        def _accumulate():
            o_ref[...] = o_ref[...] + acc

    return kernel


@lru_cache(maxsize=None)
def _build_sum_fn(with_mask: bool, steps: int, chunks_per_block: int,
                  chunk_lanes: int):
    unroll = max(1, min(2, chunks_per_block - 1))
    kernel = _make_sum_kernel(with_mask, chunks_per_block, unroll)
    block = (chunks_per_block, _SUB, chunk_lanes)
    data_map = lambda k: (k, 0, 0)
    in_specs = [pl.BlockSpec(block, data_map)]
    if with_mask:
        in_specs.append(pl.BlockSpec(block, data_map))

    call = pl.pallas_call(
        kernel,
        out_shape=jax.ShapeDtypeStruct((_SUB, chunk_lanes), jnp.float32),
        grid_spec=pltpu.PrefetchScalarGridSpec(
            num_scalar_prefetch=0,
            grid=(steps,),
            in_specs=in_specs,
            out_specs=pl.BlockSpec((_SUB, chunk_lanes), lambda k: (0, 0)),
        ),
        # Single streaming axis with a resident output accumulator -> "arbitrary".
        # TODO(synk): on v7x (2 TensorCores) shard the chunk-tile axis across
        # cores (pltpu.CORE_PARALLEL / pl.core_map) once verified in xprof; on
        # single-TC v5e/v6e a shard axis is pure overhead so it is omitted.
        compiler_params=pltpu.CompilerParams(
            dimension_semantics=("arbitrary",)),
    )

    @jax.jit
    def run(*operands):
        # Tiny epilogue: reduce the lane-dense (8, CL) accumulator to a scalar.
        return call(*operands).sum()

    return run


def _pallas_sum(scores_packed, mask_packed, plan):
    run = _build_sum_fn(mask_packed is not None, plan["steps"],
                        plan["chunks_per_block"], plan["chunk_lanes"])
    ops = (scores_packed,) if mask_packed is None else (scores_packed, mask_packed)
    return run(*ops)


class ObjectiveIncrease:
    """JAX/Pallas port of ObjectiveIncrease (forward pass)."""

    def __init__(self, on_clust_idx=0, off_clust_idc=None, clust_assignments=None,
                 *, chunk_lanes=_CHUNK_LANES, chunks_per_block=_CHUNKS_PER_BLOCK):
        self._chunk_lanes = int(chunk_lanes)
        self._chunks_per_block = int(chunks_per_block)
        self._cluster_assignments = None
        self._mask_packed = None
        self._mask_plan = None
        self._on_count = None
        self._on_clust_idx = int(on_clust_idx)
        self.set_clusters(on_clust_idx, off_clust_idc, clust_assignments)

    def set_clusters(self, on_clust_idx, off_clust_idc, clust_assignments,
                     unit_idc=None):
        # NOTE: the PyTorch reference raises NotImplementedError when
        # clust_assignments is not None; the masked branch of forward() is
        # implemented here since that is the path the kernel accelerates.
        if unit_idc is not None:
            raise NotImplementedError("passing unit_idc is not implemented.")
        del off_clust_idc  # ObjectiveIncrease only uses the "on" cluster
        self._on_clust_idx = int(on_clust_idx)
        if clust_assignments is None:
            self._cluster_assignments = None
            self._mask_packed = None
            self._mask_plan = None
            self._on_count = None
            return
        ca = np.asarray(clust_assignments)
        on_mask = ca == self._on_clust_idx
        count = int(on_mask.sum())
        assert count > 0, "on-cluster has no assigned units"
        plan = _plan(ca.size, self._chunk_lanes, self._chunks_per_block)
        # 0/1 int8 selector, padded & packed ONCE here (not per forward call):
        # 1 B/elem streamed instead of 4 B/elem int32 assignments.
        mask_i8 = np.zeros(plan["n_pad"], dtype=np.int8)
        mask_i8[:ca.size] = on_mask.astype(np.int8)
        self._cluster_assignments = ca
        self._mask_packed = jnp.asarray(
            mask_i8.reshape(plan["t_pad"], _SUB, plan["chunk_lanes"]))
        self._mask_plan = plan
        self._on_count = count

    def forward(self, unit_scores):
        # TODO(synk): the reference's in-graph `assert avg_firing_rate.isfinite()`
        # has no device-side equivalent without a host sync; checked in the demo.
        unit_scores = jnp.asarray(unit_scores)
        if self._cluster_assignments is not None:
            assert unit_scores.ndim == 2, "masked path expects (batch, num_neurons)"
            plan = self._mask_plan
            assert int(unit_scores.shape[1]) == plan["n"]
            packed = _pack(unit_scores[0], plan)
            total = _pallas_sum(packed, self._mask_packed, plan)
            return total / jnp.float32(self._on_count)
        plan = _plan(unit_scores.size, self._chunk_lanes, self._chunks_per_block)
        packed = _pack(unit_scores, plan)
        total = _pallas_sum(packed, None, plan)
        return total / jnp.float32(plan["n"])

    __call__ = forward


if __name__ == "__main__":
    key = jax.random.PRNGKey(0)
    k1, k2, k3 = jax.random.split(key, 3)

    num_neurons = 512
    num_clusters = 8
    unit_scores = jax.random.normal(k1, (1, num_neurons), dtype=jnp.float32)
    clust = np.arange(num_neurons) % num_clusters
    on_idx = 2
    off_idc = np.array([i for i in range(num_clusters) if i != on_idx])

    # Path 1: no clusters set -> mean over all unit scores (single-block path).
    obj_plain = ObjectiveIncrease()
    loss_plain = jax.block_until_ready(obj_plain(unit_scores))
    ref_plain = np.asarray(unit_scores).mean()
    assert bool(np.isfinite(loss_plain)), "loss must be finite"
    assert np.allclose(np.asarray(loss_plain), ref_plain, rtol=1e-5, atol=1e-5)

    # Path 2: clusters set -> mean over the "on" cluster's units of row 0.
    obj_on = ObjectiveIncrease(on_idx, off_idc, clust)
    loss_on = jax.block_until_ready(obj_on(unit_scores))
    ref_on = np.asarray(unit_scores)[0][clust == on_idx].mean()
    assert bool(np.isfinite(loss_on)), "loss must be finite"
    assert np.allclose(np.asarray(loss_on), ref_on, rtol=1e-5, atol=1e-5)

    # Path 3: odd N + tiny tiles -> exercises zero-padding, the multi-step
    # streaming grid, the in-kernel chunk loop, and the int8 mask path.
    n_odd = 3000
    scores_odd = jax.random.normal(k2, (1, n_odd), dtype=jnp.float32)
    clust_odd = (np.arange(n_odd) * 7) % num_clusters
    obj_tiled = ObjectiveIncrease(on_idx, off_idc, clust_odd,
                                  chunk_lanes=128, chunks_per_block=2)
    loss_odd = jax.block_until_ready(obj_tiled(scores_odd))
    ref_odd = np.asarray(scores_odd)[0][clust_odd == on_idx].mean()
    assert np.allclose(np.asarray(loss_odd), ref_odd, rtol=1e-5, atol=1e-5)

    # Path 4: plain mean, tiny tiles, non-multiple length (multi-step unmasked).
    n_plain = 5000
    scores_plain = jax.random.normal(k3, (1, n_plain), dtype=jnp.float32)
    obj_tiled_plain = ObjectiveIncrease(chunk_lanes=128, chunks_per_block=3)
    loss_tp = jax.block_until_ready(obj_tiled_plain(scores_plain))
    assert np.allclose(np.asarray(loss_tp), np.asarray(scores_plain).mean(),
                       rtol=1e-5, atol=1e-5)

    print("KERNEL_OK")
</pallas_src>

<mosaic_0001>
module attributes {stable_mosaic.version = 11 : i64} {
  func.func @kernel(%arg0: i32, %arg1: memref<1x8x128xf32, #tpu.memory_space<vmem>>, %arg2: memref<8x128xf32, #tpu.memory_space<vmem>>) attributes {dimension_semantics = [#tpu.dimension_semantics<arbitrary>], iteration_bounds = array<i64: 1>, scalar_prefetch = 0 : i64, scratch_operands = 0 : i64, tpu.core_type = #tpu.core_type<tc>, window_params = [{transform_indices = @transform_0, window_bounds = array<i64: 1, 8, 128>}, {pipeline_mode = #tpu.pipeline_mode<synchronous>, transform_indices = @transform_1, window_bounds = array<i64: 8, 128>}]} {
    %c0 = arith.constant 0 : index
    %c0_0 = arith.constant 0 : index
    %c0_1 = arith.constant 0 : index
    %0 = vector.load %arg1[%c0, %c0_0, %c0_1] : memref<1x8x128xf32, #tpu.memory_space<vmem>>, vector<1x8x128xf32>
    %1 = vector.shape_cast %0 : vector<1x8x128xf32> to vector<8x128xf32>
    %c0_i32 = arith.constant 0 : i32
    %2 = arith.cmpi eq, %arg0, %c0_i32 : i32
    %3 = arith.extui %2 : i1 to i32
    %c0_i32_2 = arith.constant 0 : i32
    %4 = arith.cmpi ne, %3, %c0_i32_2 : i32
    scf.if %4 {
      %c0_5 = arith.constant 0 : index
      %c0_6 = arith.constant 0 : index
      %8 = vector.load %arg2[%c0_5, %c0_6] : memref<8x128xf32, #tpu.memory_space<vmem>>, vector<8x128xf32>
      tpu.vector_store %arg2[%c0_5, %c0_6], %1 {strides = array<i32>} : memref<8x128xf32, #tpu.memory_space<vmem>>, vector<8x128xf32>,
    } else {
    }
    %c0_i32_3 = arith.constant 0 : i32
    %5 = arith.cmpi sgt, %arg0, %c0_i32_3 : i32
    %6 = arith.extui %5 : i1 to i32
    %c0_i32_4 = arith.constant 0 : i32
    %7 = arith.cmpi ne, %6, %c0_i32_4 : i32
    scf.if %7 {
      %c0_5 = arith.constant 0 : index
      %c0_6 = arith.constant 0 : index
      %8 = vector.load %arg2[%c0_5, %c0_6] : memref<8x128xf32, #tpu.memory_space<vmem>>, vector<8x128xf32>
      %9 = arith.addf %8, %1 : vector<8x128xf32>
      %c0_7 = arith.constant 0 : index
      %c0_8 = arith.constant 0 : index
      %10 = vector.load %arg2[%c0_7, %c0_8] : memref<8x128xf32, #tpu.memory_space<vmem>>, vector<8x128xf32>
      tpu.vector_store %arg2[%c0_7, %c0_8], %9 {strides = array<i32>} : memref<8x128xf32, #tpu.memory_space<vmem>>, vector<8x128xf32>,
    } else {
    }
    return
  }
  func.func @transform_0(%arg0: i32) -> (i32, i32, i32) {
    %c0_i32 = arith.constant 0 : i32
    %c0_i32_0 = arith.constant 0 : i32
    %c0_i32_1 = arith.constant 0 : i32
    return %arg0, %c0_i32, %c0_i32_0 : i32, i32, i32
  }
  func.func @transform_1(%arg0: i32) -> (i32, i32) {
    %c0_i32 = arith.constant 0 : i32
    %c0_i32_0 = arith.constant 0 : i32
    %c0_i32_1 = arith.constant 0 : i32
    return %c0_i32, %c0_i32_0 : i32, i32
  }
}

</mosaic_0001>

<llo_original>
// kernel: run.1
$region0: #{run.1}
  #allocation0 [shape = 'u32[]', space=smem, size = 0x4, offset = 0x4, fixed_abs, tag = 'smem constant byte address 0x4 - core index']
  #allocation1 [shape = 'u32[144,128]{1,0:T(1,128)}', space=vmem, size = 0x12000, scoped, tag = 'internal scratch']
  %s0 = inlined_call_operand.hbm [shape: f32[1,8,128], index: 0, kind: input, shape index: {}]
  %s1 = inlined_call_operand.vmem [shape: f32[8,128], index: 1, kind: output, shape index: {}]
  %s2 = sld [smem:[#allocation0]]
  $region26: #{run.1} parent=0
    _
  %s4 = ssub.s32 1, %s2
  %s5 = scalar_select 0, %s4, %s2
  $region1: #{run.1} parent=0
    #allocation2 [shape = 'u8[4096]{0}', space=vmem, size = 0x1000, scoped, tag = 'input window, operand 0, single buffered']
    #allocation3 [shape = 's32[1]{0}', space=sflag, size = 0x4, scoped, tag = 'scoped memory for run.1']
    %6 = vsyncpa [#allocation3], 0
    // Predicated region
    $region2: #{run.1} parent=1 // pred_check
      _
    $region3: #{run.1} parent=1 // pred_check_branch
      %8 = sbr.rel (0) target = $region5
    $region4: #{run.1} parent=1 // pred_region
      %s10 = ssub.s32 128, 128
      %11 = vsyncadd [#allocation3], %s10
      %s13 = sshll.u32 [#allocation2], 4
      %s14 = int_to_ptr.vmem [resolvable:$true] %s13
      %16 = dma.hbm_to_vmem [thread:$0]  %s0, 128, %s14, [#allocation3]
    $region5: #{run.1} parent=1 // pred_fallthru
      _
    // Predicated region
    $region6: #{run.1} parent=1 // pred_check
      _
    $region7: #{run.1} parent=1 // pred_check_branch
      %18 = sbr.rel (0) target = $region9
    $region8: #{run.1} parent=1 // pred_region
      %19 = dma.done [#allocation3], 128
    $region9: #{run.1} parent=1 // pred_fallthru
      _
    %v20 = vld [vmem:[#allocation2] sm:$0xff]
    %p21 = scmp.eq.s32.totalorder 0, 0
    // Predicated region
    $region10: #{run.1} parent=1 // pred_check
      %p22 = pneg %p21
    $region11: #{run.1} parent=1 // pred_check_branch
      %24 = sbr.rel (%p22) target = $region13
    $region12: #{run.1} parent=1 // pred_region
      %25 = vst [vmem:[%s1] sm:$0xff] %v20
    $region13: #{run.1} parent=1 // pred_fallthru
      _
    %p26 = scmp.gt.s32.totalorder 0, 0
    // Predicated region
    $region14: #{run.1} parent=1 // pred_check
      %p27 = pneg %p26
    $region15: #{run.1} parent=1 // pred_check_branch
      %29 = sbr.rel (%p27) target = $region17
    $region16: #{run.1} parent=1 // pred_region
      %v30 = vld [vmem:[%s1] sm:$0xff]
      %v31 = vadd.f32 %v30, %v20
      %32 = vst [vmem:[%s1] sm:$0xff] %v31
    $region17: #{run.1} parent=1 // pred_fallthru
      _
    // Predicated region
    $region18: #{run.1} parent=1 // pred_check
      _
    $region19: #{run.1} parent=1 // pred_check_branch
      %34 = sbr.rel (0) target = $region21
    $region20: #{run.1} parent=1 // pred_region
      _
    $region21: #{run.1} parent=1 // pred_fallthru
      _
    // Predicated region
    $region22: #{run.1} parent=1 // pred_check
      _
    $region23: #{run.1} parent=1 // pred_check_branch
      %36 = sbr.rel (0) target = $region25
    $region24: #{run.1} parent=1 // pred_region
      _
    $region25: #{run.1} parent=1 // pred_fallthru
      _
    %37 = vsyncpa [#allocation3], 1

</llo_original>
